<compile_context>
chip_gen: v7x
topology: tpu7x:2x2x1
jax: 0.10.0
libtpu: 0.0.40
codegen_flags: <defaults>
</compile_context>

<pallas_src>
import functools
import math

import jax
import jax.numpy as jnp
from jax.experimental import pallas as pl
from jax.experimental.pallas import tpu as pltpu

LAYER_NORM_EPS = 1e-12


def _round_up(x, m):
    return (x + m - 1) // m * m


def _erf(x):
    # Abramowitz & Stegun 7.1.26 polynomial erf (~1.5e-7 max abs error), built
    # only from Mosaic-supported elementwise primitives (abs/exp/mul/add/where).
    # TODO(synk): switch to lax.erf if/when erf_p lowers natively on Mosaic.
    a1, a2, a3, a4, a5 = (0.254829592, -0.284496736, 1.421413741,
                          -1.453152027, 1.061405429)
    p = 0.3275911
    ax = jnp.abs(x)
    t = 1.0 / (1.0 + p * ax)
    poly = ((((a5 * t + a4) * t + a3) * t + a2) * t + a1) * t
    y = 1.0 - poly * jnp.exp(-ax * ax)
    return jnp.where(x >= 0.0, y, -y)


def _gelu_exact(x):
    # torch ACT2FN["gelu"]: 0.5 * x * (1 + erf(x / sqrt(2)))
    return 0.5 * x * (1.0 + _erf(x * 0.7071067811865476))


def lm_head_kernel(hid_ref, w1_ref, b1_ref, gamma_ref, beta_ref,
                   wd_ref, bd_ref, out_ref, t_ref, *, eps):
    f32 = jnp.float32

    # Compute the transform only once per row tile (vocab step 0); cache it in
    # a bf16 VMEM scratch that feeds the MXU directly on every vocab step.
    # Valid only because the vocab grid axis is sequential ("arbitrary", inner).
    @pl.when(pl.program_id(1) == 0)
    def _():
        # Small (tm,H)x(H,H) matmul: keep HIGHEST precision because LayerNorm
        # amplifies relative error; cost is negligible vs. the decoder matmul.
        h = jnp.dot(hid_ref[...], w1_ref[...],
                    preferred_element_type=f32,
                    precision=jax.lax.Precision.HIGHEST) + b1_ref[...]
        h = _gelu_exact(h)
        mean = jnp.mean(h, axis=-1, keepdims=True)
        cent = h - mean
        var = jnp.mean(cent * cent, axis=-1, keepdims=True)
        inv = jax.lax.rsqrt(var + eps)
        t_ref[...] = (cent * inv * gamma_ref[...]
                      + beta_ref[...]).astype(t_ref.dtype)

    # Decoder: bf16 (tm,H) @ bf16 (H,tn) with f32 MXU accumulation, + bias.
    # tn is a multiple of 128 -> lane-dense, unmasked stores.
    logits = jnp.dot(t_ref[...], wd_ref[...],
                     preferred_element_type=f32) + bd_ref[...]
    out_ref[...] = logits.astype(out_ref.dtype)


def _choose_row_tile(n):
    """Row tile: big for HBM-reuse of wd, but >= 2 tiles for v7x megacore."""
    if n <= 512:
        return _round_up(max(n, 1), 8)
    target = 512 if n <= 2048 else 1024
    num_tiles = -(-n // target)            # >= 2, keeps both TCs busy on v7x
    return _round_up(-(-n // num_tiles), 8)


def _choose_vocab_tile(v):
    """Vocab tile: ~1024 lanes -> few grid steps, big contiguous wd DMAs."""
    if v <= 1024:
        return _round_up(max(v, 1), 128)
    num_tiles = -(-v // 1024)
    return _round_up(-(-v // num_tiles), 128)


def _vmem_limit_bytes(tm, tn, h, out_itemsize):
    est = 2 * (tm * h * 4)                 # hidden rows (double-buffered)
    est += 2 * (h * h * 4 + 3 * h * 4)     # w1 + b1/gamma/beta
    est += 2 * (h * tn * 2 + tn * 4)       # wd tile (bf16) + bd tile
    est += 2 * (tm * tn * out_itemsize)    # logits tile
    est += tm * h * 2                      # transform scratch (bf16)
    est = est * 5 // 4 + (4 << 20)         # headroom
    return int(min(64 << 20, max(32 << 20, est)))


def yoso_lm_prediction_head(hidden_states, params, *, eps=LAYER_NORM_EPS,
                            tm=None, tn=None, out_dtype=jnp.float32):
    B, S, H = hidden_states.shape
    V = params["wd"].shape[1]
    N = B * S

    if tm is None:
        tm = _choose_row_tile(N)
    if tn is None:
        tn = _choose_vocab_tile(V)

    n_row_tiles = -(-N // tm)
    n_vocab_tiles = -(-V // tn)
    N_pad = n_row_tiles * tm
    V_pad = n_vocab_tiles * tn

    x = hidden_states.reshape(N, H).astype(jnp.float32)
    if N_pad != N:
        x = jnp.pad(x, ((0, N_pad - N), (0, 0)))

    w1 = params["w1"].astype(jnp.float32)
    b1 = params["b1"].reshape(1, H).astype(jnp.float32)
    gamma = params["gamma"].reshape(1, H).astype(jnp.float32)
    beta = params["beta"].reshape(1, H).astype(jnp.float32)

    # Decoder weights streamed from HBM as bf16: halves the dominant HBM read;
    # accumulation stays f32 inside the kernel.
    wd = params["wd"].astype(jnp.bfloat16)
    bd = params["bd"].reshape(1, V).astype(jnp.float32)
    if V_pad != V:
        wd = jnp.pad(wd, ((0, 0), (0, V_pad - V)))
        bd = jnp.pad(bd, ((0, 0), (0, V_pad - V)))

    kernel = functools.partial(lm_head_kernel, eps=eps)

    out = pl.pallas_call(
        kernel,
        out_shape=jax.ShapeDtypeStruct((N_pad, V_pad), out_dtype),
        grid_spec=pltpu.PrefetchScalarGridSpec(
            num_scalar_prefetch=0,
            grid=(n_row_tiles, n_vocab_tiles),
            in_specs=[
                pl.BlockSpec((tm, H), lambda i, j: (i, 0)),   # hidden rows
                pl.BlockSpec((H, H), lambda i, j: (0, 0)),    # transform dense W
                pl.BlockSpec((1, H), lambda i, j: (0, 0)),    # transform bias
                pl.BlockSpec((1, H), lambda i, j: (0, 0)),    # LN gamma
                pl.BlockSpec((1, H), lambda i, j: (0, 0)),    # LN beta
                pl.BlockSpec((H, tn), lambda i, j: (0, j)),   # decoder W tile (bf16)
                pl.BlockSpec((1, tn), lambda i, j: (0, j)),   # decoder bias tile
            ],
            out_specs=pl.BlockSpec((tm, tn), lambda i, j: (i, j)),
            scratch_shapes=[pltpu.VMEM((tm, H), jnp.bfloat16)],
        ),
        compiler_params=pltpu.CompilerParams(
            dimension_semantics=("parallel", "arbitrary"),
            vmem_limit_bytes=_vmem_limit_bytes(
                tm, tn, H, jnp.dtype(out_dtype).itemsize)),
    )(x, w1, b1, gamma, beta, wd, bd)

    out = out[:N, :V]
    return out.reshape(B, S, V)


def yoso_lm_prediction_head_reference(hidden_states, params,
                                      eps=LAYER_NORM_EPS):
    """Pure-JAX reference mirroring the PyTorch forward."""
    highest = jax.lax.Precision.HIGHEST
    x = jnp.dot(hidden_states, params["w1"], precision=highest) + params["b1"]
    x = jax.nn.gelu(x, approximate=False)                       # exact erf GELU
    mean = jnp.mean(x, axis=-1, keepdims=True)
    var = jnp.mean((x - mean) ** 2, axis=-1, keepdims=True)
    x = (x - mean) / jnp.sqrt(var + eps) * params["gamma"] + params["beta"]
    return jnp.dot(x, params["wd"], precision=highest) + params["bd"]


if __name__ == "__main__":
    def _run_check(B, S, H, V, key):
        keys = jax.random.split(key, 7)
        hidden = jax.random.normal(keys[0], (B, S, H), jnp.float32)
        bound = 1.0 / math.sqrt(H)
        params = {
            "w1": jax.random.uniform(keys[1], (H, H), jnp.float32, -bound, bound),
            "b1": jax.random.uniform(keys[2], (H,), jnp.float32, -bound, bound),
            "gamma": 1.0 + 0.05 * jax.random.normal(keys[3], (H,), jnp.float32),
            "beta": 0.05 * jax.random.normal(keys[4], (H,), jnp.float32),
            "wd": jax.random.uniform(keys[5], (H, V), jnp.float32, -bound, bound),
            "bd": 0.02 * jax.random.normal(keys[6], (V,), jnp.float32),
        }
        out = jax.block_until_ready(yoso_lm_prediction_head(hidden, params))
        ref = yoso_lm_prediction_head_reference(hidden, params)
        assert out.shape == (B, S, V)
        max_err = float(jnp.max(jnp.abs(out - ref)))
        assert jnp.allclose(out, ref, rtol=2e-2, atol=2e-2), max_err

    key = jax.random.PRNGKey(0)
    k1, k2 = jax.random.split(key)
    _run_check(2, 8, 32, 512, k1)   # aligned shapes
    _run_check(2, 5, 32, 333, k2)   # ragged N and V -> exercises padding path
    print("KERNEL_OK")
</pallas_src>

<mosaic_0001>
module attributes {stable_mosaic.version = 11 : i64} {
  func.func @lm_head_kernel(%arg0: i32, %arg1: i32, %arg2: memref<16x32xf32, #tpu.memory_space<vmem>>, %arg3: memref<32x32xf32, #tpu.memory_space<vmem>>, %arg4: memref<1x32xf32, #tpu.memory_space<vmem>>, %arg5: memref<1x32xf32, #tpu.memory_space<vmem>>, %arg6: memref<1x32xf32, #tpu.memory_space<vmem>>, %arg7: memref<32x512xbf16, #tpu.memory_space<vmem>>, %arg8: memref<1x512xf32, #tpu.memory_space<vmem>>, %arg9: memref<16x512xf32, #tpu.memory_space<vmem>>, %arg10: memref<16x32xbf16, #tpu.memory_space<vmem>>) attributes {dimension_semantics = [#tpu.dimension_semantics<parallel>, #tpu.dimension_semantics<arbitrary>], iteration_bounds = array<i64: 1, 1>, scalar_prefetch = 0 : i64, scratch_operands = 1 : i64, tpu.core_type = #tpu.core_type<tc>, window_params = [{transform_indices = @transform_0, window_bounds = array<i64: 16, 32>}, {pipeline_mode = #tpu.pipeline_mode<synchronous>, transform_indices = @transform_1, window_bounds = array<i64: 32, 32>}, {pipeline_mode = #tpu.pipeline_mode<synchronous>, transform_indices = @transform_2, window_bounds = array<i64: 1, 32>}, {pipeline_mode = #tpu.pipeline_mode<synchronous>, transform_indices = @transform_3, window_bounds = array<i64: 1, 32>}, {pipeline_mode = #tpu.pipeline_mode<synchronous>, transform_indices = @transform_4, window_bounds = array<i64: 1, 32>}, {transform_indices = @transform_5, window_bounds = array<i64: 32, 512>}, {transform_indices = @transform_6, window_bounds = array<i64: 1, 512>}, {transform_indices = @transform_7, window_bounds = array<i64: 16, 512>}]} {
    %c0_i32 = arith.constant 0 : i32
    %0 = arith.cmpi eq, %arg1, %c0_i32 : i32
    %1 = arith.extui %0 : i1 to i32
    %c0_i32_0 = arith.constant 0 : i32
    %2 = arith.cmpi ne, %1, %c0_i32_0 : i32
    scf.if %2 {
      %c0_8 = arith.constant 0 : index
      %c0_9 = arith.constant 0 : index
      %10 = vector.load %arg2[%c0_8, %c0_9] : memref<16x32xf32, #tpu.memory_space<vmem>>, vector<16x32xf32>
      %c0_10 = arith.constant 0 : index
      %c0_11 = arith.constant 0 : index
      %11 = vector.load %arg3[%c0_10, %c0_11] : memref<32x32xf32, #tpu.memory_space<vmem>>, vector<32x32xf32>
      %cst_12 = arith.constant dense<0.000000e+00> : vector<16x32xf32>
      %12 = tpu.matmul %10, %11, %cst_12 {dimension_numbers = #tpu.dot_dimension_numbers<[1], [0], [0], [1], [0, 0, 1, 1], [], []>, precision = #tpu.contract_precision<fp32>} : vector<16x32xf32>, vector<32x32xf32>, vector<16x32xf32> -> vector<16x32xf32>
      %c0_13 = arith.constant 0 : index
      %c0_14 = arith.constant 0 : index
      %13 = vector.load %arg4[%c0_13, %c0_14] : memref<1x32xf32, #tpu.memory_space<vmem>>, vector<1x32xf32>
      %14 = vector.broadcast %13 : vector<1x32xf32> to vector<16x32xf32>
      %15 = arith.addf %12, %14 : vector<16x32xf32>
      %cst_15 = arith.constant 5.000000e-01 : f32
      %16 = vector.broadcast %cst_15 : f32 to vector<16x32xf32>
      %17 = arith.mulf %16, %15 : vector<16x32xf32>
      %cst_16 = arith.constant 0.707106769 : f32
      %18 = vector.broadcast %cst_16 : f32 to vector<16x32xf32>
      %19 = arith.mulf %15, %18 : vector<16x32xf32>
      %20 = math.absf %19 : vector<16x32xf32>
      %cst_17 = arith.constant 0.327591091 : f32
      %21 = vector.broadcast %cst_17 : f32 to vector<16x32xf32>
      %22 = arith.mulf %21, %20 : vector<16x32xf32>
      %cst_18 = arith.constant 1.000000e+00 : f32
      %23 = vector.broadcast %cst_18 : f32 to vector<16x32xf32>
      %24 = arith.addf %23, %22 : vector<16x32xf32>
      %cst_19 = arith.constant 1.000000e+00 : f32
      %25 = vector.broadcast %cst_19 : f32 to vector<16x32xf32>
      %26 = arith.divf %25, %24 : vector<16x32xf32>
      %cst_20 = arith.constant 1.06140542 : f32
      %27 = vector.broadcast %cst_20 : f32 to vector<16x32xf32>
      %28 = arith.mulf %27, %26 : vector<16x32xf32>
      %cst_21 = arith.constant -1.45315206 : f32
      %29 = vector.broadcast %cst_21 : f32 to vector<16x32xf32>
      %30 = arith.addf %28, %29 : vector<16x32xf32>
      %31 = arith.mulf %30, %26 : vector<16x32xf32>
      %cst_22 = arith.constant 1.42141378 : f32
      %32 = vector.broadcast %cst_22 : f32 to vector<16x32xf32>
      %33 = arith.addf %31, %32 : vector<16x32xf32>
      %34 = arith.mulf %33, %26 : vector<16x32xf32>
      %cst_23 = arith.constant -0.284496725 : f32
      %35 = vector.broadcast %cst_23 : f32 to vector<16x32xf32>
      %36 = arith.addf %34, %35 : vector<16x32xf32>
      %37 = arith.mulf %36, %26 : vector<16x32xf32>
      %cst_24 = arith.constant 0.254829586 : f32
      %38 = vector.broadcast %cst_24 : f32 to vector<16x32xf32>
      %39 = arith.addf %37, %38 : vector<16x32xf32>
      %40 = arith.mulf %39, %26 : vector<16x32xf32>
      %cst_25 = arith.constant 0.000000e+00 : f32
      %41 = vector.broadcast %cst_25 : f32 to vector<16x32xf32>
      %42 = arith.subf %41, %20 : vector<16x32xf32>
      %43 = arith.mulf %42, %20 : vector<16x32xf32>
      %44 = math.exp %43 : vector<16x32xf32>
      %45 = arith.mulf %40, %44 : vector<16x32xf32>
      %cst_26 = arith.constant 1.000000e+00 : f32
      %46 = vector.broadcast %cst_26 : f32 to vector<16x32xf32>
      %47 = arith.subf %46, %45 : vector<16x32xf32>
      %cst_27 = arith.constant 0.000000e+00 : f32
      %48 = vector.broadcast %cst_27 : f32 to vector<16x32xf32>
      %49 = arith.cmpf oge, %19, %48 : vector<16x32xf32>
      %cst_28 = arith.constant 0.000000e+00 : f32
      %50 = vector.broadcast %cst_28 : f32 to vector<16x32xf32>
      %51 = arith.subf %50, %47 : vector<16x32xf32>
      %52 = arith.select %49, %47, %51 : vector<16x32xi1>, vector<16x32xf32>
      %cst_29 = arith.constant 1.000000e+00 : f32
      %53 = vector.broadcast %cst_29 : f32 to vector<16x32xf32>
      %54 = arith.addf %53, %52 : vector<16x32xf32>
      %55 = arith.mulf %17, %54 : vector<16x32xf32>
      %cst_30 = arith.constant dense<0.000000e+00> : vector<16xf32>
      %56 = vector.multi_reduction <add>, %55, %cst_30 [1] : vector<16x32xf32> to vector<16xf32>
      %57 = vector.shape_cast %56 : vector<16xf32> to vector<16x1xf32>
      %cst_31 = arith.constant 3.200000e+01 : f32
      %58 = vector.broadcast %cst_31 : f32 to vector<16x1xf32>
      %59 = arith.divf %57, %58 : vector<16x1xf32>
      %60 = vector.broadcast %59 : vector<16x1xf32> to vector<16x32xf32>
      %61 = arith.subf %55, %60 : vector<16x32xf32>
      %62 = arith.mulf %61, %61 : vector<16x32xf32>
      %cst_32 = arith.constant dense<0.000000e+00> : vector<16xf32>
      %63 = vector.multi_reduction <add>, %62, %cst_32 [1] : vector<16x32xf32> to vector<16xf32>
      %64 = vector.shape_cast %63 : vector<16xf32> to vector<16x1xf32>
      %cst_33 = arith.constant 3.200000e+01 : f32
      %65 = vector.broadcast %cst_33 : f32 to vector<16x1xf32>
      %66 = arith.divf %64, %65 : vector<16x1xf32>
      %cst_34 = arith.constant 9.99999996E-13 : f32
      %67 = vector.broadcast %cst_34 : f32 to vector<16x1xf32>
      %68 = arith.addf %66, %67 : vector<16x1xf32>
      %69 = math.rsqrt %68 : vector<16x1xf32>
      %70 = vector.broadcast %69 : vector<16x1xf32> to vector<16x32xf32>
      %71 = arith.mulf %61, %70 : vector<16x32xf32>
      %c0_35 = arith.constant 0 : index
      %c0_36 = arith.constant 0 : index
      %72 = vector.load %arg5[%c0_35, %c0_36] : memref<1x32xf32, #tpu.memory_space<vmem>>, vector<1x32xf32>
      %73 = vector.broadcast %72 : vector<1x32xf32> to vector<16x32xf32>
      %74 = arith.mulf %71, %73 : vector<16x32xf32>
      %c0_37 = arith.constant 0 : index
      %c0_38 = arith.constant 0 : index
      %75 = vector.load %arg6[%c0_37, %c0_38] : memref<1x32xf32, #tpu.memory_space<vmem>>, vector<1x32xf32>
      %76 = vector.broadcast %75 : vector<1x32xf32> to vector<16x32xf32>
      %77 = arith.addf %74, %76 : vector<16x32xf32>
      %78 = arith.truncf %77 : vector<16x32xf32> to vector<16x32xbf16>
      %c0_39 = arith.constant 0 : index
      %c0_40 = arith.constant 0 : index
      %79 = vector.load %arg10[%c0_39, %c0_40] : memref<16x32xbf16, #tpu.memory_space<vmem>>, vector<16x32xbf16>
      tpu.vector_store %arg10[%c0_39, %c0_40], %78 {strides = array<i32>} : memref<16x32xbf16, #tpu.memory_space<vmem>>, vector<16x32xbf16>,
    } else {
    }
    %c0 = arith.constant 0 : index
    %c0_1 = arith.constant 0 : index
    %3 = vector.load %arg10[%c0, %c0_1] : memref<16x32xbf16, #tpu.memory_space<vmem>>, vector<16x32xbf16>
    %c0_2 = arith.constant 0 : index
    %c0_3 = arith.constant 0 : index
    %4 = vector.load %arg7[%c0_2, %c0_3] : memref<32x512xbf16, #tpu.memory_space<vmem>>, vector<32x512xbf16>
    %cst = arith.constant dense<0.000000e+00> : vector<16x512xf32>
    %5 = tpu.matmul %3, %4, %cst {dimension_numbers = #tpu.dot_dimension_numbers<[1], [0], [0], [1], [0, 0, 1, 1], [], []>} : vector<16x32xbf16>, vector<32x512xbf16>, vector<16x512xf32> -> vector<16x512xf32>
    %c0_4 = arith.constant 0 : index
    %c0_5 = arith.constant 0 : index
    %6 = vector.load %arg8[%c0_4, %c0_5] : memref<1x512xf32, #tpu.memory_space<vmem>>, vector<1x512xf32>
    %7 = vector.broadcast %6 : vector<1x512xf32> to vector<16x512xf32>
    %8 = arith.addf %5, %7 : vector<16x512xf32>
    %c0_6 = arith.constant 0 : index
    %c0_7 = arith.constant 0 : index
    %9 = vector.load %arg9[%c0_6, %c0_7] : memref<16x512xf32, #tpu.memory_space<vmem>>, vector<16x512xf32>
    tpu.vector_store %arg9[%c0_6, %c0_7], %8 {strides = array<i32>} : memref<16x512xf32, #tpu.memory_space<vmem>>, vector<16x512xf32>,
    return
  }
  func.func @transform_0(%arg0: i32, %arg1: i32) -> (i32, i32) {
    %c0_i32 = arith.constant 0 : i32
    %c0_i32_0 = arith.constant 0 : i32
    return %arg0, %c0_i32 : i32, i32
  }
  func.func @transform_1(%arg0: i32, %arg1: i32) -> (i32, i32) {
    %c0_i32 = arith.constant 0 : i32
    %c0_i32_0 = arith.constant 0 : i32
    %c0_i32_1 = arith.constant 0 : i32
    return %c0_i32, %c0_i32_0 : i32, i32
  }
  func.func @transform_2(%arg0: i32, %arg1: i32) -> (i32, i32) {
    %c0_i32 = arith.constant 0 : i32
    %c0_i32_0 = arith.constant 0 : i32
    %c0_i32_1 = arith.constant 0 : i32
    return %c0_i32, %c0_i32_0 : i32, i32
  }
  func.func @transform_3(%arg0: i32, %arg1: i32) -> (i32, i32) {
    %c0_i32 = arith.constant 0 : i32
    %c0_i32_0 = arith.constant 0 : i32
    %c0_i32_1 = arith.constant 0 : i32
    return %c0_i32, %c0_i32_0 : i32, i32
  }
  func.func @transform_4(%arg0: i32, %arg1: i32) -> (i32, i32) {
    %c0_i32 = arith.constant 0 : i32
    %c0_i32_0 = arith.constant 0 : i32
    %c0_i32_1 = arith.constant 0 : i32
    return %c0_i32, %c0_i32_0 : i32, i32
  }
  func.func @transform_5(%arg0: i32, %arg1: i32) -> (i32, i32) {
    %c0_i32 = arith.constant 0 : i32
    %c0_i32_0 = arith.constant 0 : i32
    return %c0_i32, %arg1 : i32, i32
  }
  func.func @transform_6(%arg0: i32, %arg1: i32) -> (i32, i32) {
    %c0_i32 = arith.constant 0 : i32
    %c0_i32_0 = arith.constant 0 : i32
    return %c0_i32, %arg1 : i32, i32
  }
  func.func @transform_7(%arg0: i32, %arg1: i32) -> (i32, i32) {
    %c0_i32 = arith.constant 0 : i32
    return %arg0, %arg1 : i32, i32
  }
}

</mosaic_0001>

<llo_original>
// kernel: tpu_custom_call.1
$region0: #{tpu_custom_call.1}
  #allocation0 [shape = 'u32[]', space=smem, size = 0x4, offset = 0x4, fixed_abs, tag = 'smem constant byte address 0x4 - core index']
  #allocation1 [shape = 'u32[144,128]{1,0:T(1,128)}', space=vmem, size = 0x12000, scoped, tag = 'internal scratch']
  #allocation2 [shape = 'bf16[16,32]{1,0:T(16,128)(2,1)}', space=vmem, size = 0x1000, scoped, tag = 'scratch operand']
  %s0 = inlined_call_operand.hbm [shape: f32[16,32], index: 0, kind: input, shape index: {}]
  %s1 = inlined_call_operand.hbm [shape: f32[32,32], index: 1, kind: input, shape index: {}]
  %s2 = inlined_call_operand.vmem [shape: f32[1,32], index: 2, kind: input, shape index: {}]
  %s3 = inlined_call_operand.vmem [shape: f32[1,32], index: 3, kind: input, shape index: {}]
  %s4 = inlined_call_operand.vmem [shape: f32[1,32], index: 4, kind: input, shape index: {}]
  %s5 = inlined_call_operand.hbm [shape: bf16[32,512], index: 5, kind: input, shape index: {}]
  %s6 = inlined_call_operand.vmem [shape: f32[1,512], index: 6, kind: input, shape index: {}]
  %s7 = inlined_call_operand.hbm [shape: f32[16,512], index: 7, kind: output, shape index: {}]
  %s8 = sld [smem:[#allocation0]]
  $region54: #{tpu_custom_call.1} parent=0
    _
  %s10 = ssub.s32 1, %s8
  %s11 = scalar_select 0, %s10, %s8
  $region1: #{tpu_custom_call.1} parent=0
    #allocation3 [shape = 'u8[8192]{0}', space=vmem, size = 0x2000, scoped, tag = 'input window, operand 0, single buffered']
    #allocation4 [shape = 's32[1]{0}', space=sflag, size = 0x4, scoped, tag = 'scoped memory for tpu_custom_call.1']
    #allocation5 [shape = 's32[1]{0}', space=sflag, size = 0x4, scoped, tag = 'scoped memory for tpu_custom_call.1']
    #allocation6 [shape = 'u8[16384]{0}', space=vmem, size = 0x4000, scoped, tag = 'input window, operand 1, single buffered']
    #allocation7 [shape = 's32[1]{0}', space=sflag, size = 0x4, scoped, tag = 'scoped memory for tpu_custom_call.1']
    #allocation8 [shape = 'u8[32768]{0}', space=vmem, size = 0x8000, scoped, tag = 'input window, operand 5, single buffered']
    #allocation9 [shape = 'u8[32768]{0}', space=vmem, size = 0x8000, scoped, tag = 'output window, operand 0, single buffered']
    %12 = vsyncpa [#allocation4], 0
    %13 = vsyncpa [#allocation7], 0
    %14 = vsyncpa [#allocation5], 0
    // Predicated region
    $region2: #{tpu_custom_call.1} parent=1 // pred_check
      _
    $region3: #{tpu_custom_call.1} parent=1 // pred_check_branch
      %16 = sbr.rel (0) target = $region5
    $region4: #{tpu_custom_call.1} parent=1 // pred_region
      %s18 = ssub.s32 256, 256
      %19 = vsyncadd [#allocation4], %s18
      %s20 = sshll.u32 [#allocation3], 4
      %s21 = int_to_ptr.vmem [resolvable:$true] %s20
      %26 = dma.hbm_to_vmem [thread:$0]  %s0, 256, %s21, [#allocation4], 128, 128, 8
    $region5: #{tpu_custom_call.1} parent=1 // pred_fallthru
      _
    // Predicated region
    $region6: #{tpu_custom_call.1} parent=1 // pred_check
      _
    $region7: #{tpu_custom_call.1} parent=1 // pred_check_branch
      %28 = sbr.rel (0) target = $region9
    $region8: #{tpu_custom_call.1} parent=1 // pred_region
      %s30 = ssub.s32 512, 512
      %31 = vsyncadd [#allocation7], %s30
      %s32 = sshll.u32 [#allocation6], 4
      %s33 = int_to_ptr.vmem [resolvable:$true] %s32
      %38 = dma.hbm_to_vmem [thread:$0]  %s1, 512, %s33, [#allocation7], 128, 128, 8
    $region9: #{tpu_custom_call.1} parent=1 // pred_fallthru
      _
    // Predicated region
    $region10: #{tpu_custom_call.1} parent=1 // pred_check
      _
    $region11: #{tpu_custom_call.1} parent=1 // pred_check_branch
      %40 = sbr.rel (0) target = $region13
    $region12: #{tpu_custom_call.1} parent=1 // pred_region
      _
    $region13: #{tpu_custom_call.1} parent=1 // pred_fallthru
      _
    // Predicated region
    $region14: #{tpu_custom_call.1} parent=1 // pred_check
      _
    $region15: #{tpu_custom_call.1} parent=1 // pred_check_branch
      %42 = sbr.rel (0) target = $region17
    $region16: #{tpu_custom_call.1} parent=1 // pred_region
      _
    $region17: #{tpu_custom_call.1} parent=1 // pred_fallthru
      _
    // Predicated region
    $region18: #{tpu_custom_call.1} parent=1 // pred_check
      _
    $region19: #{tpu_custom_call.1} parent=1 // pred_check_branch
      %44 = sbr.rel (0) target = $region21
    $region20: #{tpu_custom_call.1} parent=1 // pred_region
      _
    $region21: #{tpu_custom_call.1} parent=1 // pred_fallthru
      _
    // Predicated region
    $region22: #{tpu_custom_call.1} parent=1 // pred_check
      _
    $region23: #{tpu_custom_call.1} parent=1 // pred_check_branch
      %46 = sbr.rel (0) target = $region25
    $region24: #{tpu_custom_call.1} parent=1 // pred_region
      %s48 = ssub.s32 1024, 1024
      %49 = vsyncadd [#allocation7], %s48
      %s50 = sshll.u32 [#allocation8], 4
      %s51 = int_to_ptr.vmem [resolvable:$true] %s50
      %56 = dma.hbm_to_vmem [thread:$0]  %s5, 1024, %s51, [#allocation7], 256, 256, 16
    $region25: #{tpu_custom_call.1} parent=1 // pred_fallthru
      _
    // Predicated region
    $region26: #{tpu_custom_call.1} parent=1 // pred_check
      _
    $region27: #{tpu_custom_call.1} parent=1 // pred_check_branch
      %58 = sbr.rel (0) target = $region29
    $region28: #{tpu_custom_call.1} parent=1 // pred_region
      _
    $region29: #{tpu_custom_call.1} parent=1 // pred_fallthru
      _
    // Predicated region
    $region30: #{tpu_custom_call.1} parent=1 // pred_check
      _
    $region31: #{tpu_custom_call.1} parent=1 // pred_check_branch
      %60 = sbr.rel (0) target = $region33
    $region32: #{tpu_custom_call.1} parent=1 // pred_region
      %61 = dma.done [#allocation4], 256
    $region33: #{tpu_custom_call.1} parent=1 // pred_fallthru
      _
    // Predicated region
    $region34: #{tpu_custom_call.1} parent=1 // pred_check
      _
    $region35: #{tpu_custom_call.1} parent=1 // pred_check_branch
      %63 = sbr.rel (0) target = $region37
    $region36: #{tpu_custom_call.1} parent=1 // pred_region
      %64 = dma.done [#allocation7], 512
    $region37: #{tpu_custom_call.1} parent=1 // pred_fallthru
      _
    // Predicated region
    $region38: #{tpu_custom_call.1} parent=1 // pred_check
      _
    $region39: #{tpu_custom_call.1} parent=1 // pred_check_branch
      %66 = sbr.rel (0) target = $region41
    $region40: #{tpu_custom_call.1} parent=1 // pred_region
      %67 = dma.done [#allocation7], 1024
    $region41: #{tpu_custom_call.1} parent=1 // pred_fallthru
      _
    %p69 = scmp.eq.s32.totalorder 0, 0
    // Predicated region
    $region42: #{tpu_custom_call.1} parent=1 // pred_check
      %p70 = pneg %p69
    $region43: #{tpu_custom_call.1} parent=1 // pred_check_branch
      %72 = sbr.rel (%p70) target = $region45
    $region44: #{tpu_custom_call.1} parent=1 // pred_region
      %v73 = vld [vmem:[#allocation3] sm:$0xff]
      %v74 = vld [vmem:[#allocation3 + $0x8] sm:$0xff]
      %v75 = vld [vmem:[#allocation6] sm:$0xff]
      %v76 = vld [vmem:[#allocation6 + $0x8] sm:$0xff]
      %v77 = vld [vmem:[#allocation6 + $0x10] sm:$0xff]
      %v78 = vld [vmem:[#allocation6 + $0x18] sm:$0xff]
      %v79 = vld [vmem:[%s2] sm:$0x1]
      %v81 = vlaneseq
      %v82 = vshrl.u32 %v81, 7
      %v83 = vsub.s32 0, %v82
      %v84 = vrot.slane %v79, %v83
      %vm86 = vcmask 261120
      %v88 = vsel %vm86, %v73, 0
      %v91 = vsel %vm86, %v74, 0
      %93 = vmatprep.subr.mxu0 0.0
      %v94 = vand.u32 %v75, 4294901760
      %95 = vmatpush1.msra.mxu0 %v94
      %96 = vmatprep.subr.mxu0 0.0
      %v97 = vand.u32 %v76, 4294901760
      %98 = vmatpush1.msra.mxu0 %v97
      %99 = vmatprep.subr.mxu0 0.0
      %v100 = vand.u32 %v77, 4294901760
      %101 = vmatpush1.msra.mxu0 %v100
      %102 = vmatprep.subr.mxu0 0.0
      %v103 = vand.u32 %v78, 4294901760
      %104 = vmatpush1.msra.mxu0 %v103
      %105 = vmatprep.subr.mxu0 0.0
      %106 = vmatpush1.msra.mxu0 0.0
      %107 = vmatprep.subr.mxu0 0.0
      %108 = vmatpush1.msra.mxu0 0.0
      %109 = vmatprep.subr.mxu0 0.0
      %110 = vmatpush1.msra.mxu0 0.0
      %111 = vmatprep.subr.mxu0 0.0
      %112 = vmatpush1.msra.mxu0 0.0
      %113 = vmatprep.subr.mxu0 0.0
      %114 = vmatpush1.msra.mxu0 0.0
      %115 = vmatprep.subr.mxu0 0.0
      %116 = vmatpush1.msra.mxu0 0.0
      %117 = vmatprep.subr.mxu0 0.0
      %118 = vmatpush1.msra.mxu0 0.0
      %119 = vmatprep.subr.mxu0 0.0
      %120 = vmatpush1.msra.mxu0 0.0
      %121 = vmatprep.subr.mxu0 0.0
      %122 = vmatpush1.msra.mxu0 0.0
      %123 = vmatprep.subr.mxu0 0.0
      %124 = vmatpush1.msra.mxu0 0.0
      %125 = vmatprep.subr.mxu0 0.0
      %126 = vmatpush1.msra.mxu0 0.0
      %127 = vmatprep.subr.mxu0 0.0
      %128 = vmatpush1.msra.mxu0 0.0
      %129 = vmatprep.subr.mxu0 0.0
      %130 = vmatpush1.msra.mxu0 0.0
      %131 = vmatprep.subr.mxu0 0.0
      %132 = vmatpush1.msra.mxu0 0.0
      %133 = vmatprep.subr.mxu0 0.0
      %134 = vmatpush1.msra.mxu0 0.0
      %135 = vmatprep.subr.mxu0 0.0
      %136 = vmatpush1.msra.mxu0 0.0
      %137 = vmatprep.subr.mxu0 0.0
      %138 = vmatpush1.msra.mxu0 0.0
      %139 = vmatprep.subr.mxu0 0.0
      %140 = vmatpush1.msra.mxu0 0.0
      %141 = vmatprep.subr.mxu0 0.0
      %142 = vmatpush1.msra.mxu0 0.0
      %143 = vmatprep.subr.mxu0 0.0
      %144 = vmatpush1.msra.mxu0 0.0
      %145 = vmatprep.subr.mxu0 0.0
      %146 = vmatpush1.msra.mxu0 0.0
      %147 = vmatprep.subr.mxu0 0.0
      %148 = vmatpush1.msra.mxu0 0.0
      %149 = vmatprep.subr.mxu0 0.0
      %150 = vmatpush1.msra.mxu0 0.0
      %151 = vmatprep.subr.mxu0 0.0
      %152 = vmatpush1.msra.mxu0 0.0
      %153 = vmatprep.subr.mxu0 0.0
      %154 = vmatpush1.msra.mxu0 0.0
      %155 = vmatprep.subr.mxu0 0.0
      %156 = vmatpush1.msra.mxu0 0.0
      %157 = vmatprep.subr.mxu0 0.0
      %158 = vmatpush1.msra.mxu0 0.0
      %159 = vmatprep.subr.mxu0 0.0
      %160 = vmatpush1.msra.mxu0 0.0
      %161 = vmatprep.mubr.f32.mxu0 0.0
      %v162 = vand.u32 %v88, 4294901760
      %v163 = vsub.f32 %v88, %v162
      %v164 = vand.u32 %v163, 4294901760
      %v165 = vsub.f32 %v163, %v164
      %v166 = vand.u32 %v165, 4294901760
      %167 = vmatmul.mubr.f32.gmra.mrb[0].mxu0 %v166
      %v168 = vpop.f32.mrb[0].mxu0
      %v169 = vadd.f32 %v84, %v168
      %v170 = vpop.f32.mrb[0].mxu0
      %171 = vmatprep.mubr.f32.mxu0 0.0
      %v172 = vand.u32 %v91, 4294901760
      %v173 = vsub.f32 %v91, %v172
      %v174 = vand.u32 %v173, 4294901760
      %v175 = vsub.f32 %v173, %v174
      %v176 = vand.u32 %v175, 4294901760
      %177 = vmatmul.mubr.f32.gmra.mrb[0].mxu0 %v176
      %v178 = vpop.f32.mrb[0].mxu0
      %v179 = vadd.f32 %v84, %v178
      %v180 = vpop.f32.mrb[0].mxu0
      %181 = vdwg.mxu0
      %182 = vmatprep.subr.mxu0 0.0
      %v183 = vand.u32 %v75, 4294901760
      %v184 = vsub.f32 %v75, %v183
      %v185 = vand.u32 %v184, 4294901760
      %v186 = vsub.f32 %v184, %v185
      %v187 = vand.u32 %v186, 4294901760
      %188 = vmatpush1.msra.mxu0 %v187
      %189 = vmatprep.subr.mxu0 0.0
      %v190 = vand.u32 %v76, 4294901760
      %v191 = vsub.f32 %v76, %v190
      %v192 = vand.u32 %v191, 4294901760
      %v193 = vsub.f32 %v191, %v192
      %v194 = vand.u32 %v193, 4294901760
      %195 = vmatpush1.msra.mxu0 %v194
      %196 = vmatprep.subr.mxu0 0.0
      %v197 = vand.u32 %v77, 4294901760
      %v198 = vsub.f32 %v77, %v197
      %v199 = vand.u32 %v198, 4294901760
      %v200 = vsub.f32 %v198, %v199
      %v201 = vand.u32 %v200, 4294901760
      %202 = vmatpush1.msra.mxu0 %v201
      %203 = vmatprep.subr.mxu0 0.0
      %v204 = vand.u32 %v78, 4294901760
      %v205 = vsub.f32 %v78, %v204
      %v206 = vand.u32 %v205, 4294901760
      %v207 = vsub.f32 %v205, %v206
      %v208 = vand.u32 %v207, 4294901760
      %209 = vmatpush1.msra.mxu0 %v208
      %210 = vmatprep.subr.mxu0 0.0
      %211 = vmatpush1.msra.mxu0 0.0
      %212 = vmatprep.subr.mxu0 0.0
      %213 = vmatpush1.msra.mxu0 0.0
      %214 = vmatprep.subr.mxu0 0.0
      %215 = vmatpush1.msra.mxu0 0.0
      %216 = vmatprep.subr.mxu0 0.0
      %217 = vmatpush1.msra.mxu0 0.0
      %218 = vmatprep.subr.mxu0 0.0
      %219 = vmatpush1.msra.mxu0 0.0
      %220 = vmatprep.subr.mxu0 0.0
      %221 = vmatpush1.msra.mxu0 0.0
      %222 = vmatprep.subr.mxu0 0.0
      %223 = vmatpush1.msra.mxu0 0.0
      %224 = vmatprep.subr.mxu0 0.0
      %225 = vmatpush1.msra.mxu0 0.0
      %226 = vmatprep.subr.mxu0 0.0
      %227 = vmatpush1.msra.mxu0 0.0
      %228 = vmatprep.subr.mxu0 0.0
      %229 = vmatpush1.msra.mxu0 0.0
      %230 = vmatprep.subr.mxu0 0.0
      %231 = vmatpush1.msra.mxu0 0.0
      %232 = vmatprep.subr.mxu0 0.0
      %233 = vmatpush1.msra.mxu0 0.0
      %234 = vmatprep.subr.mxu0 0.0
      %235 = vmatpush1.msra.mxu0 0.0
      %236 = vmatprep.subr.mxu0 0.0
      %237 = vmatpush1.msra.mxu0 0.0
      %238 = vmatprep.subr.mxu0 0.0
      %239 = vmatpush1.msra.mxu0 0.0
      %240 = vmatprep.subr.mxu0 0.0
      %241 = vmatpush1.msra.mxu0 0.0
      %242 = vmatprep.subr.mxu0 0.0
      %243 = vmatpush1.msra.mxu0 0.0
      %244 = vmatprep.subr.mxu0 0.0
      %245 = vmatpush1.msra.mxu0 0.0
      %246 = vmatprep.subr.mxu0 0.0
      %247 = vmatpush1.msra.mxu0 0.0
      %248 = vmatprep.subr.mxu0 0.0
      %249 = vmatpush1.msra.mxu0 0.0
      %250 = vmatprep.subr.mxu0 0.0
      %251 = vmatpush1.msra.mxu0 0.0
      %252 = vmatprep.subr.mxu0 0.0
      %253 = vmatpush1.msra.mxu0 0.0
      %254 = vmatprep.subr.mxu0 0.0
      %255 = vmatpush1.msra.mxu0 0.0
      %256 = vmatprep.subr.mxu0 0.0
      %257 = vmatpush1.msra.mxu0 0.0
      %258 = vmatprep.subr.mxu0 0.0
      %259 = vmatpush1.msra.mxu0 0.0
      %260 = vmatprep.subr.mxu0 0.0
      %261 = vmatpush1.msra.mxu0 0.0
      %262 = vmatprep.subr.mxu0 0.0
      %263 = vmatpush1.msra.mxu0 0.0
      %264 = vmatprep.subr.mxu0 0.0
      %265 = vmatpush1.msra.mxu0 0.0
      %266 = vmatprep.mubr.f32.mxu0 0.0
      %v267 = vand.u32 %v88, 4294901760
      %268 = vmatmul.mubr.f32.gmra.mrb[0].mxu0 %v267
      %v269 = vpop.f32.mrb[0].mxu0
      %v270 = vadd.f32 %v169, %v269
      %v271 = vpop.f32.mrb[0].mxu0
      %272 = vmatprep.mubr.f32.mxu0 0.0
      %v273 = vand.u32 %v91, 4294901760
      %274 = vmatmul.mubr.f32.gmra.mrb[0].mxu0 %v273
      %v275 = vpop.f32.mrb[0].mxu0
      %v276 = vadd.f32 %v179, %v275
      %v277 = vpop.f32.mrb[0].mxu0
      %278 = vdwg.mxu0
      %279 = vmatprep.subr.mxu0 0.0
      %v280 = vand.u32 %v75, 4294901760
      %v281 = vsub.f32 %v75, %v280
      %282 = vmatpush1.msra.mxu0 %v281
      %283 = vmatprep.subr.mxu0 0.0
      %v284 = vand.u32 %v76, 4294901760
      %v285 = vsub.f32 %v76, %v284
      %286 = vmatpush1.msra.mxu0 %v285
      %287 = vmatprep.subr.mxu0 0.0
      %v288 = vand.u32 %v77, 4294901760
      %v289 = vsub.f32 %v77, %v288
      %290 = vmatpush1.msra.mxu0 %v289
      %291 = vmatprep.subr.mxu0 0.0
      %v292 = vand.u32 %v78, 4294901760
      %v293 = vsub.f32 %v78, %v292
      %294 = vmatpush1.msra.mxu0 %v293
      %295 = vmatprep.subr.mxu0 0.0
      %296 = vmatpush1.msra.mxu0 0.0
      %297 = vmatprep.subr.mxu0 0.0
      %298 = vmatpush1.msra.mxu0 0.0
      %299 = vmatprep.subr.mxu0 0.0
      %300 = vmatpush1.msra.mxu0 0.0
      %301 = vmatprep.subr.mxu0 0.0
      %302 = vmatpush1.msra.mxu0 0.0
      %303 = vmatprep.subr.mxu0 0.0
      %304 = vmatpush1.msra.mxu0 0.0
      %305 = vmatprep.subr.mxu0 0.0
      %306 = vmatpush1.msra.mxu0 0.0
      %307 = vmatprep.subr.mxu0 0.0
      %308 = vmatpush1.msra.mxu0 0.0
      %309 = vmatprep.subr.mxu0 0.0
      %310 = vmatpush1.msra.mxu0 0.0
      %311 = vmatprep.subr.mxu0 0.0
      %312 = vmatpush1.msra.mxu0 0.0
      %313 = vmatprep.subr.mxu0 0.0
      %314 = vmatpush1.msra.mxu0 0.0
      %315 = vmatprep.subr.mxu0 0.0
      %316 = vmatpush1.msra.mxu0 0.0
      %317 = vmatprep.subr.mxu0 0.0
      %318 = vmatpush1.msra.mxu0 0.0
      %319 = vmatprep.subr.mxu0 0.0
      %320 = vmatpush1.msra.mxu0 0.0
      %321 = vmatprep.subr.mxu0 0.0
      %322 = vmatpush1.msra.mxu0 0.0
      %323 = vmatprep.subr.mxu0 0.0
      %324 = vmatpush1.msra.mxu0 0.0
      %325 = vmatprep.subr.mxu0 0.0
      %326 = vmatpush1.msra.mxu0 0.0
      %327 = vmatprep.subr.mxu0 0.0
      %328 = vmatpush1.msra.mxu0 0.0
      %329 = vmatprep.subr.mxu0 0.0
      %330 = vmatpush1.msra.mxu0 0.0
      %331 = vmatprep.subr.mxu0 0.0
      %332 = vmatpush1.msra.mxu0 0.0
      %333 = vmatprep.subr.mxu0 0.0
      %334 = vmatpush1.msra.mxu0 0.0
      %335 = vmatprep.subr.mxu0 0.0
      %336 = vmatpush1.msra.mxu0 0.0
      %337 = vmatprep.subr.mxu0 0.0
      %338 = vmatpush1.msra.mxu0 0.0
      %339 = vmatprep.subr.mxu0 0.0
      %340 = vmatpush1.msra.mxu0 0.0
      %341 = vmatprep.subr.mxu0 0.0
      %342 = vmatpush1.msra.mxu0 0.0
      %343 = vmatprep.subr.mxu0 0.0
      %344 = vmatpush1.msra.mxu0 0.0
      %345 = vmatprep.subr.mxu0 0.0
      %346 = vmatpush1.msra.mxu0 0.0
      %347 = vmatprep.subr.mxu0 0.0
      %348 = vmatpush1.msra.mxu0 0.0
      %349 = vmatprep.subr.mxu0 0.0
      %350 = vmatpush1.msra.mxu0 0.0
      %351 = vmatprep.mubr.f32.mxu0 0.0
      %v352 = vand.u32 %v88, 4294901760
      %v353 = vsub.f32 %v88, %v352
      %354 = vmatmul.mubr.f32.gmra.mrb[0].mxu0 %v353
      %v355 = vpop.f32.mrb[0].mxu0
      %v356 = vadd.f32 %v270, %v355
      %v357 = vpop.f32.mrb[0].mxu0
      %358 = vmatprep.mubr.f32.mxu0 0.0
      %v359 = vand.u32 %v91, 4294901760
      %v360 = vsub.f32 %v91, %v359
      %361 = vmatmul.mubr.f32.gmra.mrb[0].mxu0 %v360
      %v362 = vpop.f32.mrb[0].mxu0
      %v363 = vadd.f32 %v276, %v362
      %v364 = vpop.f32.mrb[0].mxu0
      %365 = vdwg.mxu0
      %366 = vmatprep.subr.mxu0 0.0
      %v367 = vand.u32 %v75, 4294901760
      %368 = vmatpush1.msra.mxu0 %v367
      %369 = vmatprep.subr.mxu0 0.0
      %v370 = vand.u32 %v76, 4294901760
      %371 = vmatpush1.msra.mxu0 %v370
      %372 = vmatprep.subr.mxu0 0.0
      %v373 = vand.u32 %v77, 4294901760
      %374 = vmatpush1.msra.mxu0 %v373
      %375 = vmatprep.subr.mxu0 0.0
      %v376 = vand.u32 %v78, 4294901760
      %377 = vmatpush1.msra.mxu0 %v376
      %378 = vmatprep.subr.mxu0 0.0
      %379 = vmatpush1.msra.mxu0 0.0
      %380 = vmatprep.subr.mxu0 0.0
      %381 = vmatpush1.msra.mxu0 0.0
      %382 = vmatprep.subr.mxu0 0.0
      %383 = vmatpush1.msra.mxu0 0.0
      %384 = vmatprep.subr.mxu0 0.0
      %385 = vmatpush1.msra.mxu0 0.0
      %386 = vmatprep.subr.mxu0 0.0
      %387 = vmatpush1.msra.mxu0 0.0
      %388 = vmatprep.subr.mxu0 0.0
      %389 = vmatpush1.msra.mxu0 0.0
      %390 = vmatprep.subr.mxu0 0.0
      %391 = vmatpush1.msra.mxu0 0.0
      %392 = vmatprep.subr.mxu0 0.0
      %393 = vmatpush1.msra.mxu0 0.0
      %394 = vmatprep.subr.mxu0 0.0
      %395 = vmatpush1.msra.mxu0 0.0
      %396 = vmatprep.subr.mxu0 0.0
      %397 = vmatpush1.msra.mxu0 0.0
      %398 = vmatprep.subr.mxu0 0.0
      %399 = vmatpush1.msra.mxu0 0.0
      %400 = vmatprep.subr.mxu0 0.0
      %401 = vmatpush1.msra.mxu0 0.0
      %402 = vmatprep.subr.mxu0 0.0
      %403 = vmatpush1.msra.mxu0 0.0
      %404 = vmatprep.subr.mxu0 0.0
      %405 = vmatpush1.msra.mxu0 0.0
      %406 = vmatprep.subr.mxu0 0.0
      %407 = vmatpush1.msra.mxu0 0.0
      %408 = vmatprep.subr.mxu0 0.0
      %409 = vmatpush1.msra.mxu0 0.0
      %410 = vmatprep.subr.mxu0 0.0
      %411 = vmatpush1.msra.mxu0 0.0
      %412 = vmatprep.subr.mxu0 0.0
      %413 = vmatpush1.msra.mxu0 0.0
      %414 = vmatprep.subr.mxu0 0.0
      %415 = vmatpush1.msra.mxu0 0.0
      %416 = vmatprep.subr.mxu0 0.0
      %417 = vmatpush1.msra.mxu0 0.0
      %418 = vmatprep.subr.mxu0 0.0
      %419 = vmatpush1.msra.mxu0 0.0
      %420 = vmatprep.subr.mxu0 0.0
      %421 = vmatpush1.msra.mxu0 0.0
      %422 = vmatprep.subr.mxu0 0.0
      %423 = vmatpush1.msra.mxu0 0.0
      %424 = vmatprep.subr.mxu0 0.0
      %425 = vmatpush1.msra.mxu0 0.0
      %426 = vmatprep.subr.mxu0 0.0
      %427 = vmatpush1.msra.mxu0 0.0
      %428 = vmatprep.subr.mxu0 0.0
      %429 = vmatpush1.msra.mxu0 0.0
      %430 = vmatprep.subr.mxu0 0.0
      %431 = vmatpush1.msra.mxu0 0.0
      %432 = vmatprep.subr.mxu0 0.0
      %433 = vmatpush1.msra.mxu0 0.0
      %434 = vmatprep.mubr.f32.mxu0 0.0
      %v435 = vand.u32 %v88, 4294901760
      %v436 = vsub.f32 %v88, %v435
      %v437 = vand.u32 %v436, 4294901760
      %438 = vmatmul.mubr.f32.gmra.mrb[0].mxu0 %v437
      %v439 = vpop.f32.mrb[0].mxu0
      %v440 = vadd.f32 %v356, %v439
      %v441 = vpop.f32.mrb[0].mxu0
      %442 = vmatprep.mubr.f32.mxu0 0.0
      %v443 = vand.u32 %v91, 4294901760
      %v444 = vsub.f32 %v91, %v443
      %v445 = vand.u32 %v444, 4294901760
      %446 = vmatmul.mubr.f32.gmra.mrb[0].mxu0 %v445
      %v447 = vpop.f32.mrb[0].mxu0
      %v448 = vadd.f32 %v363, %v447
      %v449 = vpop.f32.mrb[0].mxu0
      %450 = vdwg.mxu0
      %451 = vmatprep.subr.mxu0 0.0
      %v452 = vand.u32 %v75, 4294901760
      %v453 = vsub.f32 %v75, %v452
      %v454 = vand.u32 %v453, 4294901760
      %455 = vmatpush1.msra.mxu0 %v454
      %456 = vmatprep.subr.mxu0 0.0
      %v457 = vand.u32 %v76, 4294901760
      %v458 = vsub.f32 %v76, %v457
      %v459 = vand.u32 %v458, 4294901760
      %460 = vmatpush1.msra.mxu0 %v459
      %461 = vmatprep.subr.mxu0 0.0
      %v462 = vand.u32 %v77, 4294901760
      %v463 = vsub.f32 %v77, %v462
      %v464 = vand.u32 %v463, 4294901760
      %465 = vmatpush1.msra.mxu0 %v464
      %466 = vmatprep.subr.mxu0 0.0
      %v467 = vand.u32 %v78, 4294901760
      %v468 = vsub.f32 %v78, %v467
      %v469 = vand.u32 %v468, 4294901760
      %470 = vmatpush1.msra.mxu0 %v469
      %471 = vmatprep.subr.mxu0 0.0
      %472 = vmatpush1.msra.mxu0 0.0
      %473 = vmatprep.subr.mxu0 0.0
      %474 = vmatpush1.msra.mxu0 0.0
      %475 = vmatprep.subr.mxu0 0.0
      %476 = vmatpush1.msra.mxu0 0.0
      %477 = vmatprep.subr.mxu0 0.0
      %478 = vmatpush1.msra.mxu0 0.0
      %479 = vmatprep.subr.mxu0 0.0
      %480 = vmatpush1.msra.mxu0 0.0
      %481 = vmatprep.subr.mxu0 0.0
      %482 = vmatpush1.msra.mxu0 0.0
      %483 = vmatprep.subr.mxu0 0.0
      %484 = vmatpush1.msra.mxu0 0.0
      %485 = vmatprep.subr.mxu0 0.0
      %486 = vmatpush1.msra.mxu0 0.0
      %487 = vmatprep.subr.mxu0 0.0
      %488 = vmatpush1.msra.mxu0 0.0
      %489 = vmatprep.subr.mxu0 0.0
      %490 = vmatpush1.msra.mxu0 0.0
      %491 = vmatprep.subr.mxu0 0.0
      %492 = vmatpush1.msra.mxu0 0.0
      %493 = vmatprep.subr.mxu0 0.0
      %494 = vmatpush1.msra.mxu0 0.0
      %495 = vmatprep.subr.mxu0 0.0
      %496 = vmatpush1.msra.mxu0 0.0
      %497 = vmatprep.subr.mxu0 0.0
      %498 = vmatpush1.msra.mxu0 0.0
      %499 = vmatprep.subr.mxu0 0.0
      %500 = vmatpush1.msra.mxu0 0.0
      %501 = vmatprep.subr.mxu0 0.0
      %502 = vmatpush1.msra.mxu0 0.0
      %503 = vmatprep.subr.mxu0 0.0
      %504 = vmatpush1.msra.mxu0 0.0
      %505 = vmatprep.subr.mxu0 0.0
      %506 = vmatpush1.msra.mxu0 0.0
      %507 = vmatprep.subr.mxu0 0.0
      %508 = vmatpush1.msra.mxu0 0.0
      %509 = vmatprep.subr.mxu0 0.0
      %510 = vmatpush1.msra.mxu0 0.0
      %511 = vmatprep.subr.mxu0 0.0
      %512 = vmatpush1.msra.mxu0 0.0
      %513 = vmatprep.subr.mxu0 0.0
      %514 = vmatpush1.msra.mxu0 0.0
      %515 = vmatprep.subr.mxu0 0.0
      %516 = vmatpush1.msra.mxu0 0.0
      %517 = vmatprep.subr.mxu0 0.0
      %518 = vmatpush1.msra.mxu0 0.0
      %519 = vmatprep.subr.mxu0 0.0
      %520 = vmatpush1.msra.mxu0 0.0
      %521 = vmatprep.subr.mxu0 0.0
      %522 = vmatpush1.msra.mxu0 0.0
      %523 = vmatprep.subr.mxu0 0.0
      %524 = vmatpush1.msra.mxu0 0.0
      %525 = vmatprep.subr.mxu0 0.0
      %526 = vmatpush1.msra.mxu0 0.0
      %527 = vmatprep.mubr.f32.mxu0 0.0
      %v528 = vand.u32 %v88, 4294901760
      %529 = vmatmul.mubr.f32.gmra.mrb[0].mxu0 %v528
      %v530 = vpop.f32.mrb[0].mxu0
      %v531 = vadd.f32 %v440, %v530
      %v532 = vpop.f32.mrb[0].mxu0
      %533 = vmatprep.mubr.f32.mxu0 0.0
      %v534 = vand.u32 %v91, 4294901760
      %535 = vmatmul.mubr.f32.gmra.mrb[0].mxu0 %v534
      %v536 = vpop.f32.mrb[0].mxu0
      %v537 = vadd.f32 %v448, %v536
      %v538 = vpop.f32.mrb[0].mxu0
      %539 = vdwg.mxu0
      %540 = vmatprep.subr.mxu0 0.0
      %v541 = vand.u32 %v75, 4294901760
      %542 = vmatpush1.msra.mxu0 %v541
      %543 = vmatprep.subr.mxu0 0.0
      %v544 = vand.u32 %v76, 4294901760
      %545 = vmatpush1.msra.mxu0 %v544
      %546 = vmatprep.subr.mxu0 0.0
      %v547 = vand.u32 %v77, 4294901760
      %548 = vmatpush1.msra.mxu0 %v547
      %549 = vmatprep.subr.mxu0 0.0
      %v550 = vand.u32 %v78, 4294901760
      %551 = vmatpush1.msra.mxu0 %v550
      %552 = vmatprep.subr.mxu0 0.0
      %553 = vmatpush1.msra.mxu0 0.0
      %554 = vmatprep.subr.mxu0 0.0
      %555 = vmatpush1.msra.mxu0 0.0
      %556 = vmatprep.subr.mxu0 0.0
      %557 = vmatpush1.msra.mxu0 0.0
      %558 = vmatprep.subr.mxu0 0.0
      %559 = vmatpush1.msra.mxu0 0.0
      %560 = vmatprep.subr.mxu0 0.0
      %561 = vmatpush1.msra.mxu0 0.0
      %562 = vmatprep.subr.mxu0 0.0
      %563 = vmatpush1.msra.mxu0 0.0
      %564 = vmatprep.subr.mxu0 0.0
      %565 = vmatpush1.msra.mxu0 0.0
      %566 = vmatprep.subr.mxu0 0.0
      %567 = vmatpush1.msra.mxu0 0.0
      %568 = vmatprep.subr.mxu0 0.0
      %569 = vmatpush1.msra.mxu0 0.0
      %570 = vmatprep.subr.mxu0 0.0
      %571 = vmatpush1.msra.mxu0 0.0
      %572 = vmatprep.subr.mxu0 0.0
      %573 = vmatpush1.msra.mxu0 0.0
      %574 = vmatprep.subr.mxu0 0.0
      %575 = vmatpush1.msra.mxu0 0.0
      %576 = vmatprep.subr.mxu0 0.0
      %577 = vmatpush1.msra.mxu0 0.0
      %578 = vmatprep.subr.mxu0 0.0
      %579 = vmatpush1.msra.mxu0 0.0
      %580 = vmatprep.subr.mxu0 0.0
      %581 = vmatpush1.msra.mxu0 0.0
      %582 = vmatprep.subr.mxu0 0.0
      %583 = vmatpush1.msra.mxu0 0.0
      %584 = vmatprep.subr.mxu0 0.0
      %585 = vmatpush1.msra.mxu0 0.0
      %586 = vmatprep.subr.mxu0 0.0
      %587 = vmatpush1.msra.mxu0 0.0
      %588 = vmatprep.subr.mxu0 0.0
      %589 = vmatpush1.msra.mxu0 0.0
      %590 = vmatprep.subr.mxu0 0.0
      %591 = vmatpush1.msra.mxu0 0.0
      %592 = vmatprep.subr.mxu0 0.0
      %593 = vmatpush1.msra.mxu0 0.0
      %594 = vmatprep.subr.mxu0 0.0
      %595 = vmatpush1.msra.mxu0 0.0
      %596 = vmatprep.subr.mxu0 0.0
      %597 = vmatpush1.msra.mxu0 0.0
      %598 = vmatprep.subr.mxu0 0.0
      %599 = vmatpush1.msra.mxu0 0.0
      %600 = vmatprep.subr.mxu0 0.0
      %601 = vmatpush1.msra.mxu0 0.0
      %602 = vmatprep.subr.mxu0 0.0
      %603 = vmatpush1.msra.mxu0 0.0
      %604 = vmatprep.subr.mxu0 0.0
      %605 = vmatpush1.msra.mxu0 0.0
      %606 = vmatprep.subr.mxu0 0.0
      %607 = vmatpush1.msra.mxu0 0.0
      %608 = vmatprep.mubr.f32.mxu0 0.0
      %v609 = vand.u32 %v88, 4294901760
      %610 = vmatmul.mubr.f32.gmra.mrb[0].mxu0 %v609
      %v611 = vpop.f32.mrb[0].mxu0
      %v612 = vadd.f32 %v531, %v611
      %v613 = vpop.f32.mrb[0].mxu0
      %614 = vmatprep.mubr.f32.mxu0 0.0
      %v615 = vand.u32 %v91, 4294901760
      %616 = vmatmul.mubr.f32.gmra.mrb[0].mxu0 %v615
      %v617 = vpop.f32.mrb[0].mxu0
      %v618 = vadd.f32 %v537, %v617
      %v619 = vpop.f32.mrb[0].mxu0
      %620 = vdwg.mxu0
      %v621 = vmul.f32 %v612, 0.5
      %v622 = vmul.f32 %v618, 0.5
      %v623 = vmul.f32 %v612, 0.70710677
      %v624 = vmul.f32 %v618, 0.70710677
      %v625 = vand.u32 2147483647, %v623
      %v626 = vand.u32 2147483647, %v624
      %v627 = vmul.f32 %v625, 0.3275911
      %v628 = vmul.f32 %v626, 0.3275911
      %v629 = vadd.f32 %v627, 1.0
      %v630 = vadd.f32 %v628, 1.0
      %v631 = vrcp.pop %v629
      %v632 = vmul.f32 1.0, %v631
      %v633 = vrcp.pop %v630
      %v634 = vmul.f32 1.0, %v633
      %v635 = vmul.f32 %v632, 1.0614054
      %v636 = vmul.f32 %v634, 1.0614054
      %v637 = vadd.f32 %v635, -1.4531521
      %v638 = vadd.f32 %v636, -1.4531521
      %v639 = vmul.f32 %v637, %v632
      %v640 = vmul.f32 %v638, %v634
      %v641 = vadd.f32 %v639, 1.4214138
      %v642 = vadd.f32 %v640, 1.4214138
      %v643 = vmul.f32 %v641, %v632
      %v644 = vmul.f32 %v642, %v634
      %v645 = vadd.f32 %v643, -0.28449672
      %v646 = vadd.f32 %v644, -0.28449672
      %v647 = vmul.f32 %v645, %v632
      %v648 = vmul.f32 %v646, %v634
      %v649 = vadd.f32 %v647, 0.2548296
      %v650 = vadd.f32 %v648, 0.2548296
      %v651 = vmul.f32 %v649, %v632
      %v652 = vmul.f32 %v650, %v634
      %v653 = vsub.f32 0.0, %v625
      %v654 = vsub.f32 0.0, %v626
      %v655 = vmul.f32 %v653, %v625
      %v656 = vmul.f32 %v654, %v626
      %v657 = vmul.f32 %v655, 1.442695
      %v658 = vpow.pop %v657
      %v659 = vmul.f32 %v656, 1.442695
      %v660 = vpow.pop %v659
      %v661 = vmul.f32 %v651, %v658
      %v662 = vmul.f32 %v652, %v660
      %v663 = vsub.f32 1.0, %v661
      %v664 = vsub.f32 1.0, %v662
      %vm665 = vcmp.ge.f32.partialorder %v623, 0.0
      %vm666 = vcmp.ge.f32.partialorder %v624, 0.0
      %v667 = vsub.f32 0.0, %v663
      %v668 = vsub.f32 0.0, %v664
      %v669 = vsel %vm665, %v663, %v667
      %v670 = vsel %vm666, %v664, %v668
      %v671 = vadd.f32 %v669, 1.0
      %v672 = vadd.f32 %v670, 1.0
      %v673 = vmul.f32 %v621, %v671
      %v674 = vmul.f32 %v622, %v672
      %v675 = vsel %vm86, %v673, 0.0
      %676 = vadd.xlane.f32.xlu0 %v675
      %v677 = vpop.xlane.xlu0 %676
      %v678 = vsel %vm86, %v674, 0.0
      %679 = vadd.xlane.f32.xlu0 %v678
      %v680 = vpop.xlane.xlu0 %679
      %v681 = vrcp.pop 32.0
      %v682 = vmul.f32 %v677, %v681
      %v683 = vmul.f32 %v680, %v681
      %v684 = vsub.f32 %v673, %v682
      %v685 = vsub.f32 %v674, %v683
      %v686 = vmul.f32 %v684, %v684
      %v687 = vmul.f32 %v685, %v685
      %v688 = vsel %vm86, %v686, 0.0
      %689 = vadd.xlane.f32.xlu0 %v688
      %v690 = vpop.xlane.xlu0 %689
      %v691 = vsel %vm86, %v687, 0.0
      %692 = vadd.xlane.f32.xlu0 %v691
      %v693 = vpop.xlane.xlu0 %692
      %v694 = vmul.f32 %v690, %v681
      %v695 = vmul.f32 %v693, %v681
      %v696 = vadd.f32 %v694, 1e-12
      %v697 = vadd.f32 %v695, 1e-12
      %v698 = vrsqrt.pop %v696
      %v699 = vrsqrt.pop %v697
      %v700 = vmul.f32 %v684, %v698
      %v701 = vmul.f32 %v685, %v699
      %v702 = vld [vmem:[%s3] sm:$0x1]
      %v704 = vlaneseq
      %v705 = vshrl.u32 %v704, 7
      %v706 = vsub.s32 0, %v705
      %v707 = vrot.slane %v702, %v706
      %v709 = vmul.f32 %v700, %v707
      %v710 = vmul.f32 %v701, %v707
      %v711 = vld [vmem:[%s4] sm:$0x1]
      %v713 = vlaneseq
      %v714 = vshrl.u32 %v713, 7
      %v715 = vsub.s32 0, %v714
      %v716 = vrot.slane %v711, %v715
      %v718 = vadd.f32 %v709, %v716
      %v719 = vadd.f32 %v710, %v716
      %v720 = vpack.c.bf16 %v719, %v718
      %721 = vst.msk [vmem:[#allocation2] sm:$0xff] %vm86, %v720
    $region45: #{tpu_custom_call.1} parent=1 // pred_fallthru
      _
    %v722 = vld [vmem:[#allocation2] sm:$0xff]
    %v723 = vld [vmem:[#allocation8] sm:$0xff]
    %v724 = vld [vmem:[#allocation8 + $0x8] sm:$0xff]
    %v725 = vld [vmem:[#allocation8 + $0x10] sm:$0xff]
    %v726 = vld [vmem:[#allocation8 + $0x18] sm:$0xff]
    %v727 = vld [vmem:[#allocation8 + $0x20] sm:$0xff]
    %v728 = vld [vmem:[#allocation8 + $0x28] sm:$0xff]
    %v729 = vld [vmem:[#allocation8 + $0x30] sm:$0xff]
    %v730 = vld [vmem:[#allocation8 + $0x38] sm:$0xff]
    %v731 = vld [vmem:[%s6] sm:$0xf]
    %v733 = vlaneseq
    %v734 = vshrl.u32 %v733, 7
    %v735 = vsub.s32 0, %v734
    %v736 = vrot.slane %v731, %v735
    %v737 = vlaneseq
    %v738 = vshrl.u32 %v737, 7
    %v739 = vsub.s32 1, %v738
    %v740 = vrot.slane %v731, %v739
    %v741 = vlaneseq
    %v742 = vshrl.u32 %v741, 7
    %v743 = vsub.s32 2, %v742
    %v744 = vrot.slane %v731, %v743
    %v745 = vlaneseq
    %v746 = vshrl.u32 %v745, 7
    %v747 = vsub.s32 3, %v746
    %v748 = vrot.slane %v731, %v747
    %v761 = vunpack.c.l.b16 %v723
    %v762 = vunpack.c.h.b16 %v723
    %v763 = vunpack.c.l.b16 %v724
    %v764 = vunpack.c.h.b16 %v724
    %v765 = vunpack.c.l.b16 %v725
    %v766 = vunpack.c.h.b16 %v725
    %v767 = vunpack.c.l.b16 %v726
    %v768 = vunpack.c.h.b16 %v726
    %v769 = vunpack.c.l.b16 %v727
    %v770 = vunpack.c.h.b16 %v727
    %v771 = vunpack.c.l.b16 %v728
    %v772 = vunpack.c.h.b16 %v728
    %v773 = vunpack.c.l.b16 %v729
    %v774 = vunpack.c.h.b16 %v729
    %v775 = vunpack.c.l.b16 %v730
    %v776 = vunpack.c.h.b16 %v730
    %v777 = vpack.c.b16 %v765, %v761
    %v778 = vpack.c.b16 %v766, %v762
    %v779 = vpack.c.b16 %v767, %v763
    %v780 = vpack.c.b16 %v768, %v764
    %v781 = vpack.c.b16 %v773, %v769
    %v782 = vpack.c.b16 %v774, %v770
    %v783 = vpack.c.b16 %v775, %v771
    %v784 = vpack.c.b16 %v776, %v772
    %vm793 = vcmask 261120
    %v795 = vsel %vm793, %v722, 0
    %797 = vmatprep.subr.bf16.mxu0 %v778
    %798 = vmatpush1.bf16.msra.mxu0 %v777
    %799 = vmatprep.subr.bf16.mxu0 %v782
    %800 = vmatpush1.bf16.msra.mxu0 %v781
    %801 = vmatprep.subr.bf16.mxu0 0
    %802 = vmatpush1.bf16.msra.mxu0 0
    %803 = vmatprep.subr.bf16.mxu0 0
    %804 = vmatpush1.bf16.msra.mxu0 0
    %805 = vmatprep.subr.bf16.mxu0 0
    %806 = vmatpush1.bf16.msra.mxu0 0
    %807 = vmatprep.subr.bf16.mxu0 0
    %808 = vmatpush1.bf16.msra.mxu0 0
    %809 = vmatprep.subr.bf16.mxu0 0
    %810 = vmatpush1.bf16.msra.mxu0 0
    %811 = vmatprep.subr.bf16.mxu0 0
    %812 = vmatpush1.bf16.msra.mxu0 0
    %813 = vmatprep.subr.bf16.mxu0 0
    %814 = vmatpush1.bf16.msra.mxu0 0
    %815 = vmatprep.subr.bf16.mxu0 0
    %816 = vmatpush1.bf16.msra.mxu0 0
    %817 = vmatprep.subr.bf16.mxu0 0
    %818 = vmatpush1.bf16.msra.mxu0 0
    %819 = vmatprep.subr.bf16.mxu0 0
    %820 = vmatpush1.bf16.msra.mxu0 0
    %821 = vmatprep.subr.bf16.mxu0 0
    %822 = vmatpush1.bf16.msra.mxu0 0
    %823 = vmatprep.subr.bf16.mxu0 0
    %824 = vmatpush1.bf16.msra.mxu0 0
    %825 = vmatprep.subr.bf16.mxu0 0
    %826 = vmatpush1.bf16.msra.mxu0 0
    %827 = vmatprep.subr.bf16.mxu0 0
    %828 = vmatpush1.bf16.msra.mxu0 0
    %829 = vmatprep.mubr.bf16.mxu0 0
    %830 = vmatmul.mubr.bf16.gmra.mrb[0].mxu0 %v795
    %v831 = vpop.f32.mrb[0].mxu0
    %v832 = vadd.f32 %v736, %v831
    %v833 = vpop.f32.mrb[0].mxu0
    %v834 = vadd.f32 %v740, %v833
    %v835 = vpop.f32.mrb[0].mxu0
    %v836 = vadd.f32 %v736, %v835
    %v837 = vpop.f32.mrb[0].mxu0
    %v838 = vadd.f32 %v740, %v837
    %839 = vdwg.mxu0
    %840 = vmatprep.subr.bf16.mxu0 %v780
    %841 = vmatpush1.bf16.msra.mxu0 %v779
    %842 = vmatprep.subr.bf16.mxu0 %v784
    %843 = vmatpush1.bf16.msra.mxu0 %v783
    %844 = vmatprep.subr.bf16.mxu0 0
    %845 = vmatpush1.bf16.msra.mxu0 0
    %846 = vmatprep.subr.bf16.mxu0 0
    %847 = vmatpush1.bf16.msra.mxu0 0
    %848 = vmatprep.subr.bf16.mxu0 0
    %849 = vmatpush1.bf16.msra.mxu0 0
    %850 = vmatprep.subr.bf16.mxu0 0
    %851 = vmatpush1.bf16.msra.mxu0 0
    %852 = vmatprep.subr.bf16.mxu0 0
    %853 = vmatpush1.bf16.msra.mxu0 0
    %854 = vmatprep.subr.bf16.mxu0 0
    %855 = vmatpush1.bf16.msra.mxu0 0
    %856 = vmatprep.subr.bf16.mxu0 0
    %857 = vmatpush1.bf16.msra.mxu0 0
    %858 = vmatprep.subr.bf16.mxu0 0
    %859 = vmatpush1.bf16.msra.mxu0 0
    %860 = vmatprep.subr.bf16.mxu0 0
    %861 = vmatpush1.bf16.msra.mxu0 0
    %862 = vmatprep.subr.bf16.mxu0 0
    %863 = vmatpush1.bf16.msra.mxu0 0
    %864 = vmatprep.subr.bf16.mxu0 0
    %865 = vmatpush1.bf16.msra.mxu0 0
    %866 = vmatprep.subr.bf16.mxu0 0
    %867 = vmatpush1.bf16.msra.mxu0 0
    %868 = vmatprep.subr.bf16.mxu0 0
    %869 = vmatpush1.bf16.msra.mxu0 0
    %870 = vmatprep.subr.bf16.mxu0 0
    %871 = vmatpush1.bf16.msra.mxu0 0
    %872 = vmatprep.mubr.bf16.mxu0 0
    %873 = vmatmul.mubr.bf16.gmra.mrb[0].mxu0 %v795
    %v874 = vpop.f32.mrb[0].mxu0
    %v875 = vadd.f32 %v744, %v874
    %v876 = vpop.f32.mrb[0].mxu0
    %v877 = vadd.f32 %v748, %v876
    %v878 = vpop.f32.mrb[0].mxu0
    %v879 = vadd.f32 %v744, %v878
    %v880 = vpop.f32.mrb[0].mxu0
    %v881 = vadd.f32 %v748, %v880
    %882 = vdwg.mxu0
    %883 = vst [vmem:[#allocation9] sm:$0xff] %v832
    %884 = vst [vmem:[#allocation9 + $0x8] sm:$0xff] %v834
    %885 = vst [vmem:[#allocation9 + $0x10] sm:$0xff] %v875
    %886 = vst [vmem:[#allocation9 + $0x18] sm:$0xff] %v877
    %887 = vst [vmem:[#allocation9 + $0x20] sm:$0xff] %v836
    %888 = vst [vmem:[#allocation9 + $0x28] sm:$0xff] %v838
    %889 = vst [vmem:[#allocation9 + $0x30] sm:$0xff] %v879
    %890 = vst [vmem:[#allocation9 + $0x38] sm:$0xff] %v881
    // Predicated region
    $region46: #{tpu_custom_call.1} parent=1 // pred_check
      _
    $region47: #{tpu_custom_call.1} parent=1 // pred_check_branch
      %892 = sbr.rel (0) target = $region49
    $region48: #{tpu_custom_call.1} parent=1 // pred_region
      %s894 = ssub.s32 1024, 1024
      %895 = vsyncadd [#allocation5], %s894
      %s896 = sshll.u32 [#allocation9], 4
      %s897 = int_to_ptr.vmem [resolvable:$true] %s896
      %902 = dma.vmem_to_hbm [thread:$0]  %s897, 1024, %s7, [#allocation5], 512, 512, 32
    $region49: #{tpu_custom_call.1} parent=1 // pred_fallthru
      _
    // Predicated region
    $region50: #{tpu_custom_call.1} parent=1 // pred_check
      _
    $region51: #{tpu_custom_call.1} parent=1 // pred_check_branch
      %904 = sbr.rel (0) target = $region53
    $region52: #{tpu_custom_call.1} parent=1 // pred_region
      %905 = dma.done [#allocation5], 1024
    $region53: #{tpu_custom_call.1} parent=1 // pred_fallthru
      _
    %906 = vsyncpa [#allocation4], 1
    %907 = vsyncpa [#allocation7], 1
    %908 = vsyncpa [#allocation5], 1

</llo_original>
